<compile_context>
chip_gen: v7x
topology: tpu7x:2x2x1
jax: 0.10.0
libtpu: 0.0.40
codegen_flags: <defaults>
</compile_context>

<pallas_src>
import numpy as np
import jax
import jax.numpy as jnp
from jax.experimental import pallas as pl
from jax.experimental.pallas import tpu as pltpu


# ----------------------------- Pallas kernel -------------------------------

def _spectral_mix_kernel(w_ref, x_ref, o_ref):
    # w_ref: (C_msi, C_hsi)   band-normalized mixing matrix (tiny, resident)
    # x_ref: (1, C_hsi, TILE) one batch's channels x lane-dense spatial tile
    # o_ref: (1, C_msi, TILE) lane-dense output tile (full-width stores)
    o_ref[0] = jnp.dot(
        w_ref[...], x_ref[0], preferred_element_type=jnp.float32
    ).astype(o_ref.dtype)


# --------------------------- tile / VMEM sizing -----------------------------

def _tpu_vmem_capacity_bytes():
    """Best-effort physical VMEM query; falls back to 128 MiB (v5e/v6e)."""
    try:
        info = pltpu.get_tpu_info()
        return int(getattr(info, "vmem_capacity_bytes", 128 << 20))
    except Exception:
        return 128 << 20


def _choose_spatial_tile(HW, B, c_in, c_out, in_itemsize, out_itemsize):
    """Bytes-based spatial tile selection (see header notes)."""
    vmem_bytes = _tpu_vmem_capacity_bytes()
    small_vmem = vmem_bytes <= (64 << 20)            # v7x-like chip
    # Target size of ONE input block; v7x's higher HBM BW shifts the optimum up.
    target_in_bytes = (6 << 20) if small_vmem else (4 << 20)
    # Budget for the double-buffered (input + output) blocks: ~24 MiB on
    # v7x (64 MiB physical), ~48 MiB on v5e/v6e (128 MiB physical).
    pipeline_budget = min((vmem_bytes // 8) * 3, 48 << 20)

    per_col_in = c_in * in_itemsize
    per_col_pipelined = 2 * (c_in * in_itemsize + c_out * out_itemsize)

    tile = (target_in_bytes // per_col_in) // 128 * 128
    tile = min(tile, (pipeline_budget // per_col_pipelined) // 128 * 128)
    tile = max(tile, 128)

    if B == 1 and HW > 2 * 128:
        # Guarantee >= ~4 spatial grid steps so both v7x TensorCores get work
        # and the pipeline has something to overlap (no effect on v5e/v6e).
        tile = min(tile, max(128, (HW // 4) // 128 * 128))

    if tile >= HW:
        tile = HW                                     # full-extent block (always legal)
    return tile, vmem_bytes


# ------------------------------ pallas_call ---------------------------------

def spectral_mix_pallas(x3d, w_t, *, out_dtype=None, spatial_tile=None):
    """x3d: (B, C_hsi, HW), w_t: (C_msi, C_hsi) -> (B, C_msi, HW)."""
    B, C_hsi, HW = x3d.shape
    C_msi, C_hsi_w = w_t.shape
    assert C_hsi_w == C_hsi, "weight matrix / input channel mismatch"
    out_dtype = x3d.dtype if out_dtype is None else out_dtype

    in_itemsize = jnp.dtype(x3d.dtype).itemsize
    out_itemsize = jnp.dtype(out_dtype).itemsize

    if spatial_tile is None:
        tile, vmem_bytes = _choose_spatial_tile(
            HW, B, C_hsi, C_msi, in_itemsize, out_itemsize)
    else:
        tile = min(int(spatial_tile), HW)
        if tile < HW:
            tile = max(128, (tile // 128) * 128)      # lane-dense partial tiles
        vmem_bytes = _tpu_vmem_capacity_bytes()

    grid = (B, pl.cdiv(HW, tile))

    # Explicit scoped-VMEM limit: double-buffered in/out blocks + weights + slack,
    # capped well under physical VMEM (v5e default of 16 MiB is otherwise limiting).
    need = (2 * tile * (C_hsi * in_itemsize + C_msi * out_itemsize)
            + 2 * C_msi * C_hsi * in_itemsize)
    vmem_limit = int(min(max(need + (2 << 20), 16 << 20), vmem_bytes // 2))

    cost = pl.CostEstimate(
        flops=2 * B * HW * C_hsi * C_msi,
        transcendentals=0,
        bytes_accessed=(B * HW * C_hsi * in_itemsize
                        + B * HW * C_msi * out_itemsize
                        + C_msi * C_hsi * in_itemsize),
    )

    return pl.pallas_call(
        _spectral_mix_kernel,
        out_shape=jax.ShapeDtypeStruct((B, C_msi, HW), out_dtype),
        grid_spec=pltpu.PrefetchScalarGridSpec(
            num_scalar_prefetch=0,
            grid=grid,
            in_specs=[
                # Tiny weight matrix: constant block -> fetched once, resident.
                pl.BlockSpec((C_msi, C_hsi), lambda b, j: (0, 0)),
                # Input: all channels x a lane-dense spatial tile of batch b.
                pl.BlockSpec((1, C_hsi, tile), lambda b, j: (b, 0, j)),
            ],
            out_specs=pl.BlockSpec((1, C_msi, tile), lambda b, j: (b, 0, j)),
        ),
        compiler_params=pltpu.CompilerParams(
            dimension_semantics=("parallel", "parallel"),
            vmem_limit_bytes=vmem_limit,
        ),
        cost_estimate=cost,
    )(w_t, x3d)


# ----------------------------- Module wrapper -------------------------------

def build_band_weights(sp_range, hsi_channels, key):
    """Per-band 1x1-conv weights and the folded, row-normalized
    (C_msi, C_hsi) mixing matrix consumed by the kernel.

    Folding the module's post-conv divide-by-weight-sum into the weights is
    mathematically identical to the PyTorch forward.  Test weights are drawn
    from U[0.2, 1.0] (positive) so the module's divide-by-raw-sum is well
    conditioned; any weights with a nonzero sum behave identically.
    """
    sp_range = np.asarray(sp_range).astype(int)
    msi_channels = sp_range.shape[0]
    lengths = (sp_range[:, 1] - sp_range[:, 0] + 1).tolist()

    w_t = np.zeros((msi_channels, hsi_channels), dtype=np.float32)
    band_weights = []
    for i, L in enumerate(lengths):
        key, sub = jax.random.split(key)
        w_i = np.asarray(jax.random.uniform(sub, (L,), jnp.float32, 0.2, 1.0))
        band_weights.append(w_i)
        s = sp_range[i, 0]
        w_t[i, s:s + L] = w_i / w_i.sum()   # conv then divide-by-sum, folded
    return band_weights, jnp.asarray(w_t)


def convolution_hr2msi_forward(x_nchw, w_t, *, compute_dtype=jnp.bfloat16,
                               spatial_tile=None):
    """x_nchw: (B, C_hsi, H, W) -> (B, C_msi, H, W), matching the PyTorch module.

    `compute_dtype` is the HBM storage dtype inside the kernel (bf16 by
    default to halve HBM traffic); accumulation is f32 and the output keeps
    the caller's dtype.  Pass jnp.float32 for full-precision storage.
    """
    B, C_hsi, H, W = x_nchw.shape
    C_msi = w_t.shape[0]
    out_dtype = x_nchw.dtype
    # Flatten spatial only (contiguous, no data movement) — no transposes.
    x3d = x_nchw.reshape(B, C_hsi, H * W).astype(compute_dtype)
    y3d = spectral_mix_pallas(x3d, w_t.astype(compute_dtype),
                              out_dtype=out_dtype, spatial_tile=spatial_tile)
    return y3d.reshape(B, C_msi, H, W)


# ----------------------------------- main -----------------------------------

if __name__ == "__main__":
    key = jax.random.PRNGKey(0)

    # Small, consistent shapes: 16 HSI bands, 4 MSI bands, 16x16 spatial.
    B, C_hsi, H, W = 2, 16, 16, 16
    sp_range = np.array([[0, 3], [4, 7], [8, 11], [12, 15]], dtype=np.int64)
    C_msi = sp_range.shape[0]

    key, k_w, k_x = jax.random.split(key, 3)
    band_weights, w_t = build_band_weights(sp_range, C_hsi, k_w)
    x = jax.random.normal(k_x, (B, C_hsi, H, W), jnp.float32)

    out = convolution_hr2msi_forward(x, w_t)          # default bf16-storage path
    out = jax.block_until_ready(out)
    assert out.shape == (B, C_msi, H, W)
    assert out.dtype == x.dtype

    # Host reference mirroring the module's per-band slice -> 1x1 conv ->
    # divide-by-weight-sum -> concat, with the same bf16 storage quantization
    # the kernel applies to x / the normalized weights (f64 accumulation).
    x_q = np.asarray(x.astype(jnp.bfloat16).astype(jnp.float32)).astype(np.float64)
    w_q = np.asarray(w_t.astype(jnp.bfloat16).astype(jnp.float32)).astype(np.float64)
    ref_bands = []
    for i in range(C_msi):
        s, e = int(sp_range[i, 0]), int(sp_range[i, 1])
        w_row = w_q[i, s:e + 1]          # == w_i / sum(w_i): conv + divide folded
        sl = x_q[:, s:e + 1, :, :]
        ref_bands.append(np.einsum("c,bchw->bhw", w_row, sl)[:, None, :, :])
    ref = np.concatenate(ref_bands, axis=1)

    np.testing.assert_allclose(np.asarray(out).astype(np.float64), ref,
                               rtol=1e-5, atol=1e-5)
    print("KERNEL_OK")
</pallas_src>

<mosaic_0001>
module attributes {stable_mosaic.version = 11 : i64} {
  func.func @_spectral_mix_kernel(%arg0: i32, %arg1: i32, %arg2: memref<4x16xbf16, #tpu.memory_space<vmem>>, %arg3: memref<1x16x256xbf16, #tpu.memory_space<vmem>>, %arg4: memref<1x4x256xf32, #tpu.memory_space<vmem>>) attributes {dimension_semantics = [#tpu.dimension_semantics<parallel>, #tpu.dimension_semantics<parallel>], iteration_bounds = array<i64: 2, 1>, scalar_prefetch = 0 : i64, scratch_operands = 0 : i64, tpu.core_type = #tpu.core_type<tc>, window_params = [{pipeline_mode = #tpu.pipeline_mode<synchronous>, transform_indices = @transform_0, window_bounds = array<i64: 4, 16>}, {transform_indices = @transform_1, window_bounds = array<i64: 1, 16, 256>}, {transform_indices = @transform_2, window_bounds = array<i64: 1, 4, 256>}]} {
    %c0 = arith.constant 0 : index
    %c0_0 = arith.constant 0 : index
    %0 = vector.load %arg2[%c0, %c0_0] : memref<4x16xbf16, #tpu.memory_space<vmem>>, vector<4x16xbf16>
    %c0_1 = arith.constant 0 : index
    %c0_2 = arith.constant 0 : index
    %c0_3 = arith.constant 0 : index
    %1 = vector.load %arg3[%c0_1, %c0_2, %c0_3] : memref<1x16x256xbf16, #tpu.memory_space<vmem>>, vector<1x16x256xbf16>
    %2 = vector.shape_cast %1 : vector<1x16x256xbf16> to vector<16x256xbf16>
    %cst = arith.constant dense<0.000000e+00> : vector<4x256xf32>
    %3 = tpu.matmul %0, %2, %cst {dimension_numbers = #tpu.dot_dimension_numbers<[1], [0], [0], [1], [0, 0, 1, 1], [], []>} : vector<4x16xbf16>, vector<16x256xbf16>, vector<4x256xf32> -> vector<4x256xf32>
    %c0_4 = arith.constant 0 : index
    %c0_5 = arith.constant 0 : index
    %c0_6 = arith.constant 0 : index
    %4 = vector.load %arg4[%c0_4, %c0_5, %c0_6] : memref<1x4x256xf32, #tpu.memory_space<vmem>>, vector<1x4x256xf32>
    %5 = vector.shape_cast %4 : vector<1x4x256xf32> to vector<4x256xf32>
    %6 = vector.shape_cast %3 : vector<4x256xf32> to vector<1x4x256xf32>
    tpu.vector_store %arg4[%c0_4, %c0_5, %c0_6], %6 {strides = array<i32>} : memref<1x4x256xf32, #tpu.memory_space<vmem>>, vector<1x4x256xf32>,
    return
  }
  func.func @transform_0(%arg0: i32, %arg1: i32) -> (i32, i32) {
    %c0_i32 = arith.constant 0 : i32
    %c0_i32_0 = arith.constant 0 : i32
    %c0_i32_1 = arith.constant 0 : i32
    return %c0_i32, %c0_i32_0 : i32, i32
  }
  func.func @transform_1(%arg0: i32, %arg1: i32) -> (i32, i32, i32) {
    %c0_i32 = arith.constant 0 : i32
    %c0_i32_0 = arith.constant 0 : i32
    return %arg0, %c0_i32, %arg1 : i32, i32, i32
  }
  func.func @transform_2(%arg0: i32, %arg1: i32) -> (i32, i32, i32) {
    %c0_i32 = arith.constant 0 : i32
    %c0_i32_0 = arith.constant 0 : i32
    return %arg0, %c0_i32, %arg1 : i32, i32, i32
  }
}

</mosaic_0001>

<llo_original>
// kernel: tpu_custom_call.1
$region0: #{tpu_custom_call.1}
  #allocation0 [shape = 'u32[]', space=smem, size = 0x4, offset = 0x4, fixed_abs, tag = 'smem constant byte address 0x4 - core index']
  #allocation1 [shape = 'u32[144,128]{1,0:T(1,128)}', space=vmem, size = 0x12000, scoped, tag = 'internal scratch']
  %s0 = inlined_call_operand.hbm [shape: bf16[4,16], index: 0, kind: input, shape index: {}]
  %s1 = inlined_call_operand.hbm [shape: bf16[2,16,256], index: 1, kind: input, shape index: {}]
  %s2 = inlined_call_operand.hbm [shape: f32[2,4,256], index: 2, kind: output, shape index: {}]
  %s3 = sld [smem:[#allocation0]]
  $region49: #{tpu_custom_call.1} parent=0
    _
  %s5 = ssub.s32 1, %s3
  %s6 = scalar_select 0, %s5, %s3
  $region1: #{tpu_custom_call.1} parent=0
    #allocation2 [shape = 'u8[1024]{0}', space=vmem, size = 0x400, scoped, tag = 'input window, operand 0, single buffered']
    #allocation3 [shape = 's32[2]{0}', space=sflag, size = 0x8, scoped, tag = 'scoped memory for tpu_custom_call.1']
    #allocation4 [shape = 's32[2]{0}', space=sflag, size = 0x8, scoped, tag = 'scoped memory for tpu_custom_call.1']
    #allocation5 [shape = 'u8[16384]{0}', space=vmem, size = 0x4000, scoped, tag = 'input window, operand 1']
    #allocation6 [shape = 's32[2]{0}', space=sflag, size = 0x8, scoped, tag = 'scoped memory for tpu_custom_call.1']
    #allocation7 [shape = 'u8[8192]{0}', space=vmem, size = 0x2000, scoped, tag = 'output window, operand 0']
    %7 = vsyncpa [#allocation3], 0
    %8 = vsyncpa [#allocation6], 0
    %s9 = scalar_lea.sflag [#allocation6], 1
    %10 = vsyncpa %s9, 0
    %11 = vsyncpa [#allocation4], 0
    %s12 = scalar_lea.sflag [#allocation4], 1
    %13 = vsyncpa %s12, 0
    loop: start=0, step=1, limit=4
    $region2: #{tpu_custom_call.1} parent=1 // loop_pre_header
      _
    $region3: #{tpu_custom_call.1} parent=1 // loop_header
      %s15 = sphi 0, %s19
      %p16 = scmp.ge.s32.totalorder %s15, 4
      %s22 = sphi 0, %s34
      %s23 = sphi 0, %s30
      %s24 = sphi 0, %s22
      %s25 = sphi 0, %s23
      %s26 = sphi 0, %s24
      %s27 = sphi 0, %s25
      %s35 = sphi 0, %s35
      %s37 = sphi 0, %s35
      %s38 = sphi 0, %s37
      %s52 = sphi 0, %s38
      %s60 = sphi 0, %s62
      %s63 = sphi 0, %s60
      %s64 = sphi 0, %s63
      %s80 = sphi 0, %s64
      %s88 = sphi 0, %s90
      %s91 = sphi 0, %s88
      %s92 = sphi 0, %s91
      %s108 = sphi 0, %s92
    $region4: #{tpu_custom_call.1} parent=1 // loop_header_branch
      %18 = sbr.rel (%p16) target = $region8
    $region5: #{tpu_custom_call.1} parent=1 // loop_body
      %s20 = ssub.s32 %s15, 1
      %s21 = ssub.s32 %s15, 2
      %s28 = sadd.s32 1, %s23
      %p29 = scmp.ge.s32.totalorder %s28, 1
      %s30 = scalar_select %p29, 0, %s28
      %s31 = sadd.s32 1, %s22
      %s32 = scalar_select %p29, %s31, %s22
      %p33 = scmp.ge.s32.totalorder %s32, 2
      %s34 = scalar_select %p33, 0, %s32
      %s36 = sadd.s32 %s35, 1
      %p39 = scmp.eq.s32.totalorder %s15, 1
      %p40 = scmp.ne.s32.totalorder %s35, %s37
      %p41 = scmp.eq.s32.totalorder %s15, 0
      %p42 = por %p40, %p41
      %p43 = scmp.ne.s32.totalorder %s35, %s37
      %p44 = scmp.eq.s32.totalorder %s20, 1
      %p45 = por %p43, %p44
      %p46 = scmp.ne.s32.totalorder %s37, %s38
      %p47 = scmp.eq.s32.totalorder %s20, 0
      %p48 = por %p46, %p47
      %p49 = scmp.ne.s32.totalorder %s37, %s38
      %p50 = scmp.eq.s32.totalorder %s21, 1
      %p51 = por %p49, %p50
      %p53 = scmp.ne.s32.totalorder %s38, %s52
      %p54 = scmp.eq.s32.totalorder %s21, 0
      %p55 = por %p53, %p54
      %s56 = ssub.s32 %s22, %s34
      %s57 = ssub.s32 %s23, %s30
      %s58 = sor.u32 %s56, %s57
      %p59 = scmp.eq.s32.totalorder %s58, 0
      %s61 = sadd.s32 %s60, 1
      %s62 = scalar_select %p59, %s60, %s61
      %p65 = pneg %p59
      %p66 = scmp.eq.s32.totalorder %s15, 1
      %p67 = por %p65, %p66
      %p68 = scmp.ne.s32.totalorder %s60, %s63
      %p69 = scmp.eq.s32.totalorder %s15, 0
      %p70 = por %p68, %p69
      %p71 = scmp.ne.s32.totalorder %s60, %s63
      %p72 = scmp.eq.s32.totalorder %s20, 1
      %p73 = por %p71, %p72
      %p74 = scmp.ne.s32.totalorder %s63, %s64
      %p75 = scmp.eq.s32.totalorder %s20, 0
      %p76 = por %p74, %p75
      %p77 = scmp.ne.s32.totalorder %s63, %s64
      %p78 = scmp.eq.s32.totalorder %s21, 1
      %p79 = por %p77, %p78
      %p81 = scmp.ne.s32.totalorder %s64, %s80
      %p82 = scmp.eq.s32.totalorder %s21, 0
      %p83 = por %p81, %p82
      %s84 = ssub.s32 %s22, %s34
      %s85 = ssub.s32 %s23, %s30
      %s86 = sor.u32 %s84, %s85
      %p87 = scmp.eq.s32.totalorder %s86, 0
      %s89 = sadd.s32 %s88, 1
      %s90 = scalar_select %p87, %s88, %s89
      %p93 = pneg %p87
      %p94 = scmp.eq.s32.totalorder %s15, 1
      %p95 = por %p93, %p94
      %p96 = scmp.ne.s32.totalorder %s88, %s91
      %p97 = scmp.eq.s32.totalorder %s15, 0
      %p98 = por %p96, %p97
      %p99 = scmp.ne.s32.totalorder %s88, %s91
      %p100 = scmp.eq.s32.totalorder %s20, 1
      %p101 = por %p99, %p100
      %p102 = scmp.ne.s32.totalorder %s91, %s92
      %p103 = scmp.eq.s32.totalorder %s20, 0
      %p104 = por %p102, %p103
      %p105 = scmp.ne.s32.totalorder %s91, %s92
      %p106 = scmp.eq.s32.totalorder %s21, 1
      %p107 = por %p105, %p106
      %p109 = scmp.ne.s32.totalorder %s92, %s108
      %p110 = scmp.eq.s32.totalorder %s21, 0
      %p111 = por %p109, %p110
      %p112 = scmp.le.s32.totalorder 1, %s15
      %p113 = scmp.lt.s32.totalorder %s15, 3
      %p114 = pnand %p112, %p113
      %p115 = pneg %p114
      // Predicated region
      $region9: #{tpu_custom_call.1} parent=5 // pred_check
        _
      $region10: #{tpu_custom_call.1} parent=5 // pred_check_branch
        %117 = sbr.rel (%p114) target = $region12
      $region11: #{tpu_custom_call.1} parent=5 // pred_region
        %s118 = ssub.s32 %s15, 1
        // Predicated region
        $region13: #{tpu_custom_call.1} parent=11 // pred_check
          %p119 = pneg %p48
        $region14: #{tpu_custom_call.1} parent=11 // pred_check_branch
          %121 = sbr.rel (%p119) target = $region16
        $region15: #{tpu_custom_call.1} parent=11 // pred_region
          %s123 = ssub.s32 32, 32
          %124 = vsyncadd [#allocation3], %s123
          %s126 = sshll.u32 [#allocation2], 4
          %s127 = int_to_ptr.vmem [resolvable:$true] %s126
          %129 = dma.hbm_to_vmem [thread:$0]  %s0, 32, %s127, [#allocation3]
        $region16: #{tpu_custom_call.1} parent=11 // pred_fallthru
          _
      $region12: #{tpu_custom_call.1} parent=5 // pred_fallthru
        _
      %p130 = scmp.lt.s32.totalorder %s15, 2
      // Predicated region
      $region17: #{tpu_custom_call.1} parent=5 // pred_check
        %p131 = pneg %p130
      $region18: #{tpu_custom_call.1} parent=5 // pred_check_branch
        %133 = sbr.rel (%p131) target = $region20
      $region19: #{tpu_custom_call.1} parent=5 // pred_region
        // Predicated region
        $region21: #{tpu_custom_call.1} parent=19 // pred_check
          %p134 = pneg %p70
        $region22: #{tpu_custom_call.1} parent=19 // pred_check_branch
          %136 = sbr.rel (%p134) target = $region24
        $region23: #{tpu_custom_call.1} parent=19 // pred_region
          %s137 = sand.u32 %s60, 1
          %s138 = scalar_lea.sflag [#allocation6], %s137
          %s139 = sand.u32 %s60, 1
          %s140 = smul.addr %s139, 16
          %s141 = scalar_lea.vmem [#allocation5], %s140
          %s142 = smul.u32 2, %s23
          %s144 = ssub.s32 256, 256
          %145 = vsyncadd %s138, %s144
          %s146 = smul.addr %s22, 4
          %s147 = sadd.s32 %s142, %s146
          %s148 = smul.addr %s147, 64
          %s149 = scalar_lea.hbm %s1, %s148
          %s150 = sshll.u32 %s141, 4
          %s151 = int_to_ptr.vmem [resolvable:$true] %s150
          %156 = dma.hbm_to_vmem [thread:$0]  %s149, 256, %s151, %s138, 128, 128, 8
        $region24: #{tpu_custom_call.1} parent=19 // pred_fallthru
          _
      $region20: #{tpu_custom_call.1} parent=5 // pred_fallthru
        _
      %p157 = scmp.le.s32.totalorder 1, %s15
      %p158 = scmp.lt.s32.totalorder %s15, 3
      %p159 = pnand %p157, %p158
      %p160 = pneg %p159
      // Predicated region
      $region25: #{tpu_custom_call.1} parent=5 // pred_check
        _
      $region26: #{tpu_custom_call.1} parent=5 // pred_check_branch
        %162 = sbr.rel (%p159) target = $region28
      $region27: #{tpu_custom_call.1} parent=5 // pred_region
        %s163 = ssub.s32 %s15, 1
        // Predicated region
        $region29: #{tpu_custom_call.1} parent=27 // pred_check
          %p164 = pneg %p48
        $region30: #{tpu_custom_call.1} parent=27 // pred_check_branch
          %166 = sbr.rel (%p164) target = $region32
        $region31: #{tpu_custom_call.1} parent=27 // pred_region
          %167 = dma.done [#allocation3], 32
        $region32: #{tpu_custom_call.1} parent=27 // pred_fallthru
          _
        %s168 = sand.u32 %s63, 1
        %s169 = scalar_lea.sflag [#allocation6], %s168
        %s170 = sand.u32 %s63, 1
        %s171 = smul.addr %s170, 16
        %s172 = scalar_lea.vmem [#allocation5], %s171
        // Predicated region
        $region33: #{tpu_custom_call.1} parent=27 // pred_check
          %p173 = pneg %p76
        $region34: #{tpu_custom_call.1} parent=27 // pred_check_branch
          %175 = sbr.rel (%p173) target = $region36
        $region35: #{tpu_custom_call.1} parent=27 // pred_region
          %176 = dma.done %s169, 256
        $region36: #{tpu_custom_call.1} parent=27 // pred_fallthru
          _
        %p177 = pneg %p48
        %p178 = pneg %p45
        %s179 = sand.u32 %s63, 1
        %s180 = scalar_lea.sflag [#allocation6], %s179
        %s181 = sand.u32 %s63, 1
        %s182 = smul.addr %s181, 16
        %s183 = scalar_lea.vmem [#allocation5], %s182
        %p184 = pneg %p76
        %p185 = pneg %p73
        %p186 = pneg %p104
        %p187 = pneg %p101
        %s188 = sand.u32 %s91, 1
        %s189 = scalar_lea.sflag [#allocation4], %s188
        %s190 = sand.u32 %s91, 1
        %s191 = smul.addr %s190, 8
        %s192 = scalar_lea.vmem [#allocation7], %s191
        %s193 = smul.u32 2, %s25
        %s194 = smul.u32 2, %s25
        %v196 = vld [vmem:[#allocation2] sm:$0x3]
        %v197 = vld [vmem:[%s172] sm:$0xff]
        %v198 = vld [vmem:[%s172 + $0x8] sm:$0xff]
        %v201 = vunpack.c.l.b16 %v197
        %v202 = vunpack.c.h.b16 %v197
        %v203 = vunpack.c.l.b16 %v198
        %v204 = vunpack.c.h.b16 %v198
        %v205 = vpack.c.b16 %v203, %v201
        %v206 = vpack.c.b16 %v204, %v202
        %vm209 = vcmask 130048
        %v211 = vsel %vm209, %v196, 0
        %213 = vmatprep.subr.bf16.mxu0 %v206
        %214 = vmatpush1.bf16.msra.mxu0 %v205
        %215 = vmatprep.subr.bf16.mxu0 0
        %216 = vmatpush1.bf16.msra.mxu0 0
        %217 = vmatprep.subr.bf16.mxu0 0
        %218 = vmatpush1.bf16.msra.mxu0 0
        %219 = vmatprep.subr.bf16.mxu0 0
        %220 = vmatpush1.bf16.msra.mxu0 0
        %221 = vmatprep.subr.bf16.mxu0 0
        %222 = vmatpush1.bf16.msra.mxu0 0
        %223 = vmatprep.subr.bf16.mxu0 0
        %224 = vmatpush1.bf16.msra.mxu0 0
        %225 = vmatprep.subr.bf16.mxu0 0
        %226 = vmatpush1.bf16.msra.mxu0 0
        %227 = vmatprep.subr.bf16.mxu0 0
        %228 = vmatpush1.bf16.msra.mxu0 0
        %229 = vmatprep.subr.bf16.mxu0 0
        %230 = vmatpush1.bf16.msra.mxu0 0
        %231 = vmatprep.subr.bf16.mxu0 0
        %232 = vmatpush1.bf16.msra.mxu0 0
        %233 = vmatprep.subr.bf16.mxu0 0
        %234 = vmatpush1.bf16.msra.mxu0 0
        %235 = vmatprep.subr.bf16.mxu0 0
        %236 = vmatpush1.bf16.msra.mxu0 0
        %237 = vmatprep.subr.bf16.mxu0 0
        %238 = vmatpush1.bf16.msra.mxu0 0
        %239 = vmatprep.subr.bf16.mxu0 0
        %240 = vmatpush1.bf16.msra.mxu0 0
        %241 = vmatprep.subr.bf16.mxu0 0
        %242 = vmatpush1.bf16.msra.mxu0 0
        %243 = vmatprep.subr.bf16.mxu0 0
        %244 = vmatpush1.bf16.msra.mxu0 0
        %245 = vmatprep.mubr.bf16.mxu0 0
        %246 = vmatmul.mubr.bf16.gmra.mrb[0].mxu0 %v211
        %v247 = vpop.f32.mrb[0].mxu0
        %v248 = vadd.f32 0.0, %v247
        %v249 = vpop.f32.mrb[0].mxu0
        %v250 = vadd.f32 0.0, %v249
        %v251 = vpop.f32.mrb[0].mxu0
        %v252 = vpop.f32.mrb[0].mxu0
        %253 = vdwg.mxu0
        %v256 = vcombine.low %v248, %v250
        %258 = vst [vmem:[%s192] sm:$0xff] %v256
        %s259 = sand.u32 %s91, 1
        %s260 = scalar_lea.sflag [#allocation4], %s259
        %s261 = sand.u32 %s91, 1
        %s262 = smul.addr %s261, 8
        %s263 = scalar_lea.vmem [#allocation7], %s262
        // Predicated region
        $region37: #{tpu_custom_call.1} parent=27 // pred_check
          %p264 = pneg %p101
        $region38: #{tpu_custom_call.1} parent=27 // pred_check_branch
          %266 = sbr.rel (%p264) target = $region40
        $region39: #{tpu_custom_call.1} parent=27 // pred_region
          %s267 = smul.u32 2, %s25
          %s269 = ssub.s32 128, 128
          %270 = vsyncadd %s260, %s269
          %s271 = smul.addr %s24, 2
          %s272 = sadd.s32 %s267, %s271
          %s273 = smul.addr %s272, 64
          %s274 = scalar_lea.hbm %s2, %s273
          %s276 = sshll.u32 %s263, 4
          %s277 = int_to_ptr.vmem [resolvable:$true] %s276
          %279 = dma.vmem_to_hbm [thread:$0]  %s277, 128, %s274, %s260
        $region40: #{tpu_custom_call.1} parent=27 // pred_fallthru
          _
      $region28: #{tpu_custom_call.1} parent=5 // pred_fallthru
        _
      %p280 = scmp.le.s32.totalorder 2, %s15
      // Predicated region
      $region41: #{tpu_custom_call.1} parent=5 // pred_check
        %p281 = pneg %p280
      $region42: #{tpu_custom_call.1} parent=5 // pred_check_branch
        %283 = sbr.rel (%p281) target = $region44
      $region43: #{tpu_custom_call.1} parent=5 // pred_region
        %s284 = ssub.s32 %s15, 2
        // Predicated region
        $region45: #{tpu_custom_call.1} parent=43 // pred_check
          %p285 = pneg %p107
        $region46: #{tpu_custom_call.1} parent=43 // pred_check_branch
          %287 = sbr.rel (%p285) target = $region48
        $region47: #{tpu_custom_call.1} parent=43 // pred_region
          %s288 = sand.u32 %s92, 1
          %s289 = scalar_lea.sflag [#allocation4], %s288
          %s290 = sand.u32 %s92, 1
          %s291 = smul.addr %s290, 8
          %s292 = scalar_lea.vmem [#allocation7], %s291
          %293 = dma.done %s289, 128
        $region48: #{tpu_custom_call.1} parent=43 // pred_fallthru
          _
      $region44: #{tpu_custom_call.1} parent=5 // pred_fallthru
        _
    $region6: #{tpu_custom_call.1} parent=1 // loop_footer
      %s19 = sadd.s32 1, %s15
    $region7: #{tpu_custom_call.1} parent=1 // loop_footer_branch
      %14 = sbr.rel target = $region3
    $region8: #{tpu_custom_call.1} parent=1 // loop_exit
      _
    %294 = vsyncpa [#allocation3], 1
    %s295 = scalar_lea.sflag [#allocation3], 1
    %296 = vsyncpa %s295, 1
    %297 = vsyncpa [#allocation6], 1
    %s298 = scalar_lea.sflag [#allocation6], 1
    %299 = vsyncpa %s298, 1
    %300 = vsyncpa [#allocation4], 1
    %s301 = scalar_lea.sflag [#allocation4], 1
    %302 = vsyncpa %s301, 1

</llo_original>
